<compile_context>
chip_gen: v7x
topology: tpu7x:2x2x1
jax: 0.10.0
libtpu: 0.0.40
codegen_flags: <defaults>
</compile_context>

<pallas_src>
import jax
import jax.numpy as jnp
from jax import lax
from jax.experimental import pallas as pl
from jax.experimental.pallas import tpu as pltpu


def _round_up(x, m):
    return (x + m - 1) // m * m


def _sub_factorized_embedding_kernel(ids_ref, w_ref, out_ref):
    # ids_ref : (G, pack)        int32   token ids, pack tokens per group
    # w_ref   : (E, d)           f32     reconstructed embedding table (resident)
    # out_ref : (G, pack * d)    f32     lane-dense packed output block
    g, pack = ids_ref.shape
    e, d = w_ref.shape

    w = w_ref[...]                                                     # (E, d)
    iota = lax.broadcasted_iota(jnp.int32, (g, e), 1)                  # (G, E)

    # pack is tiny and static (e.g. 4) -> unrolled at trace time.
    for j in range(pack):
        # One-hot gather as a matmul with MXU-aligned contraction K = E.
        onehot = (iota == ids_ref[:, j:j + 1]).astype(jnp.float32)     # (G, E)
        out_ref[:, j * d:(j + 1) * d] = jnp.dot(
            onehot, w, preferred_element_type=jnp.float32)             # (G, d)


def sub_factorized_embedding(x, a1, a2, b1, b2, cp_weights, layer_factor,
                             indices, *, tile_n=4096):
    """Pallas forward of SubFactorizedEmbedding(main_layer, indices)(x)."""
    batch_shape = x.shape
    ids = x.reshape(-1).astype(jnp.int32)
    n = int(ids.shape[0])

    i1, r = a1.shape
    i2, _ = a2.shape
    j1, _ = b1.shape
    j2, _ = b2.shape
    e = i1 * i2            # num_embeddings
    d = j1 * j2            # embedding_dim

    # ---- Hoisted, tiny, one-time weight reconstruction (XLA) -----------------
    # `indices` is a static attribute of the sub-layer -> the per-layer CP
    # scale is folded here, once per call.
    scale = (cp_weights.astype(jnp.float32)
             * layer_factor.astype(jnp.float32)[indices])              # (R,)
    ka = (a1.astype(jnp.float32)[:, None, :]
          * a2.astype(jnp.float32)[None, :, :]).reshape(e, r)          # (E, R)
    kb = (b1.astype(jnp.float32)[:, None, :]
          * b2.astype(jnp.float32)[None, :, :]).reshape(d, r)          # (D, R)
    w = (ka * scale[None, :]) @ kb.T                                   # (E, D) f32

    # ---- Lane packing / tiling setup -----------------------------------------
    pack = 128 // d if (d < 128 and 128 % d == 0) else 1
    min_tile = 8 * pack                      # keeps every block dim (8,128)-legal

    tile_n = _round_up(int(max(min_tile, tile_n)), min_tile)
    # Don't pad more than necessary for small N.
    tile_n = min(tile_n, _round_up(n, min_tile))
    # Keep >= 2 grid steps when N allows it (v7x shards "parallel" over 2 TCs).
    if n >= 2 * min_tile:
        tile_n = min(tile_n, _round_up((n + 1) // 2, min_tile))
    tile_n = max(tile_n, min_tile)

    n_pad = _round_up(n, tile_n)
    if n_pad != n:
        ids = jnp.pad(ids, (0, n_pad - n))   # pad ids = 0; rows sliced off below
    ids = ids.reshape(n_pad // pack, pack)

    num_tiles = n_pad // tile_n
    gt = tile_n // pack                      # groups (output rows) per tile

    cost = pl.CostEstimate(
        flops=2 * n_pad * e * d,
        transcendentals=0,
        bytes_accessed=n_pad * 4 + n_pad * d * 4 + e * d * 4,
    )

    out = pl.pallas_call(
        _sub_factorized_embedding_kernel,
        out_shape=jax.ShapeDtypeStruct((n_pad // pack, pack * d), jnp.float32),
        grid=(num_tiles,),
        in_specs=[
            pl.BlockSpec((gt, pack), lambda i: (i, 0)),   # ids: tiled over tokens
            pl.BlockSpec((e, d), lambda i: (0, 0)),       # W: resident (constant map)
        ],
        out_specs=pl.BlockSpec((gt, pack * d), lambda i: (i, 0)),
        compiler_params=pltpu.CompilerParams(
            dimension_semantics=("parallel",),
            vmem_limit_bytes=32 * 1024 * 1024,
        ),
        cost_estimate=cost,
    )(ids, w)

    # (n_pad//pack, pack*d) is row-major identical to (n_pad, d): free reshape.
    out = out.reshape(n_pad, d)
    if n_pad != n:
        out = out[:n]
    return out.reshape(*batch_shape, d)


def _reference(x, a1, a2, b1, b2, cp_weights, layer_factor, indices):
    """Pure-JAX reference: reconstruct full weight, plain gather."""
    i1, r = a1.shape
    i2, _ = a2.shape
    j1, _ = b1.shape
    j2, _ = b2.shape
    ka = (a1[:, None, :] * a2[None, :, :]).reshape(i1 * i2, r)
    kb = (b1[:, None, :] * b2[None, :, :]).reshape(j1 * j2, r)
    w_full = (ka * (cp_weights * layer_factor[indices])[None, :]) @ kb.T
    return w_full[x.reshape(-1)].reshape(*x.shape, j1 * j2)


if __name__ == "__main__":
    # Small synthetic configuration consistent with a FactorizedEmbedding main layer:
    # tensorized_num_embeddings = (8, 16)  -> num_embeddings = 128
    # tensorized_embedding_dim  = (4, 8)   -> embedding_dim  = 32
    # CP rank = 8, n_layers = 2, this sub-embedding uses indices = 1.
    I1, I2, J1, J2, R, N_LAYERS = 8, 16, 4, 8, 8, 2
    INDICES = 1
    batch, seq = 2, 40   # 80 tokens -> multiple tiles + a padded tail at tile_n=32

    key = jax.random.PRNGKey(0)
    k_ids, k_a1, k_a2, k_b1, k_b2, k_w, k_l = jax.random.split(key, 7)

    x = jax.random.randint(k_ids, (batch, seq), 0, I1 * I2, dtype=jnp.int32)
    a1 = jax.random.normal(k_a1, (I1, R), dtype=jnp.float32) * 0.1
    a2 = jax.random.normal(k_a2, (I2, R), dtype=jnp.float32) * 0.1
    b1 = jax.random.normal(k_b1, (J1, R), dtype=jnp.float32) * 0.1
    b2 = jax.random.normal(k_b2, (J2, R), dtype=jnp.float32) * 0.1
    cp_weights = jax.random.normal(k_w, (R,), dtype=jnp.float32) * 0.1 + 1.0
    layer_factor = jax.random.normal(k_l, (N_LAYERS, R), dtype=jnp.float32) * 0.1 + 1.0

    # tile_n=32 at this toy size forces a 3-step grid (2 full tiles + 1 padded),
    # exercising the tiled/packed/padded path; production sizes use the 4096 default.
    out = sub_factorized_embedding(x, a1, a2, b1, b2, cp_weights, layer_factor,
                                   INDICES, tile_n=32)
    out = jax.block_until_ready(out)

    ref = _reference(x, a1, a2, b1, b2, cp_weights, layer_factor, INDICES)
    assert out.shape == (batch, seq, J1 * J2), out.shape
    assert jnp.allclose(out, ref, atol=1e-5, rtol=1e-5), "mismatch vs reference"
    print("KERNEL_OK")
</pallas_src>

<mosaic_0001>
module attributes {stable_mosaic.version = 11 : i64} {
  func.func @_sub_factorized_embedding_kernel(%arg0: i32, %arg1: memref<8x4xi32, #tpu.memory_space<vmem>>, %arg2: memref<128x32xf32, #tpu.memory_space<vmem>>, %arg3: memref<8x128xf32, #tpu.memory_space<vmem>>) attributes {dimension_semantics = [#tpu.dimension_semantics<parallel>], iteration_bounds = array<i64: 3>, scalar_prefetch = 0 : i64, scratch_operands = 0 : i64, tpu.core_type = #tpu.core_type<tc>, window_params = [{transform_indices = @transform_0, window_bounds = array<i64: 8, 4>}, {pipeline_mode = #tpu.pipeline_mode<synchronous>, transform_indices = @transform_1, window_bounds = array<i64: 128, 32>}, {transform_indices = @transform_2, window_bounds = array<i64: 8, 128>}]} {
    %c0 = arith.constant 0 : index
    %c0_0 = arith.constant 0 : index
    %0 = vector.load %arg2[%c0, %c0_0] : memref<128x32xf32, #tpu.memory_space<vmem>>, vector<128x32xf32>
    %1 = tpu.iota {dimensions = array<i32: 1>} : vector<8x128xi32>
    %c0_1 = arith.constant 0 : index
    %c0_2 = arith.constant 0 : index
    %2 = vector.load %arg1[%c0_1, %c0_2] : memref<8x4xi32, #tpu.memory_space<vmem>>, vector<8x1xi32>
    %3 = vector.broadcast %2 : vector<8x1xi32> to vector<8x128xi32>
    %4 = arith.cmpi eq, %1, %3 : vector<8x128xi32>
    %5 = arith.extui %4 : vector<8x128xi1> to vector<8x128xi32>
    %6 = arith.sitofp %5 : vector<8x128xi32> to vector<8x128xf32>
    %cst = arith.constant dense<0.000000e+00> : vector<8x32xf32>
    %7 = tpu.matmul %6, %0, %cst {dimension_numbers = #tpu.dot_dimension_numbers<[1], [0], [0], [1], [0, 0, 1, 1], [], []>} : vector<8x128xf32>, vector<128x32xf32>, vector<8x32xf32> -> vector<8x32xf32>
    %c0_3 = arith.constant 0 : index
    %c0_4 = arith.constant 0 : index
    %8 = vector.load %arg3[%c0_3, %c0_4] : memref<8x128xf32, #tpu.memory_space<vmem>>, vector<8x32xf32>
    tpu.vector_store %arg3[%c0_3, %c0_4], %7 {strides = array<i32>} : memref<8x128xf32, #tpu.memory_space<vmem>>, vector<8x32xf32>,
    %c0_5 = arith.constant 0 : index
    %c1 = arith.constant 1 : index
    %9 = vector.load %arg1[%c0_5, %c1] : memref<8x4xi32, #tpu.memory_space<vmem>>, vector<8x1xi32>
    %10 = vector.broadcast %9 : vector<8x1xi32> to vector<8x128xi32>
    %11 = arith.cmpi eq, %1, %10 : vector<8x128xi32>
    %12 = arith.extui %11 : vector<8x128xi1> to vector<8x128xi32>
    %13 = arith.sitofp %12 : vector<8x128xi32> to vector<8x128xf32>
    %cst_6 = arith.constant dense<0.000000e+00> : vector<8x32xf32>
    %14 = tpu.matmul %13, %0, %cst_6 {dimension_numbers = #tpu.dot_dimension_numbers<[1], [0], [0], [1], [0, 0, 1, 1], [], []>} : vector<8x128xf32>, vector<128x32xf32>, vector<8x32xf32> -> vector<8x32xf32>
    %c0_7 = arith.constant 0 : index
    %c32 = arith.constant 32 : index
    %15 = vector.load %arg3[%c0_7, %c32] : memref<8x128xf32, #tpu.memory_space<vmem>>, vector<8x32xf32>
    tpu.vector_store %arg3[%c0_7, %c32], %14 {strides = array<i32>} : memref<8x128xf32, #tpu.memory_space<vmem>>, vector<8x32xf32>,
    %c0_8 = arith.constant 0 : index
    %c2 = arith.constant 2 : index
    %16 = vector.load %arg1[%c0_8, %c2] : memref<8x4xi32, #tpu.memory_space<vmem>>, vector<8x1xi32>
    %17 = vector.broadcast %16 : vector<8x1xi32> to vector<8x128xi32>
    %18 = arith.cmpi eq, %1, %17 : vector<8x128xi32>
    %19 = arith.extui %18 : vector<8x128xi1> to vector<8x128xi32>
    %20 = arith.sitofp %19 : vector<8x128xi32> to vector<8x128xf32>
    %cst_9 = arith.constant dense<0.000000e+00> : vector<8x32xf32>
    %21 = tpu.matmul %20, %0, %cst_9 {dimension_numbers = #tpu.dot_dimension_numbers<[1], [0], [0], [1], [0, 0, 1, 1], [], []>} : vector<8x128xf32>, vector<128x32xf32>, vector<8x32xf32> -> vector<8x32xf32>
    %c0_10 = arith.constant 0 : index
    %c64 = arith.constant 64 : index
    %22 = vector.load %arg3[%c0_10, %c64] : memref<8x128xf32, #tpu.memory_space<vmem>>, vector<8x32xf32>
    tpu.vector_store %arg3[%c0_10, %c64], %21 {strides = array<i32>} : memref<8x128xf32, #tpu.memory_space<vmem>>, vector<8x32xf32>,
    %c0_11 = arith.constant 0 : index
    %c3 = arith.constant 3 : index
    %23 = vector.load %arg1[%c0_11, %c3] : memref<8x4xi32, #tpu.memory_space<vmem>>, vector<8x1xi32>
    %24 = vector.broadcast %23 : vector<8x1xi32> to vector<8x128xi32>
    %25 = arith.cmpi eq, %1, %24 : vector<8x128xi32>
    %26 = arith.extui %25 : vector<8x128xi1> to vector<8x128xi32>
    %27 = arith.sitofp %26 : vector<8x128xi32> to vector<8x128xf32>
    %cst_12 = arith.constant dense<0.000000e+00> : vector<8x32xf32>
    %28 = tpu.matmul %27, %0, %cst_12 {dimension_numbers = #tpu.dot_dimension_numbers<[1], [0], [0], [1], [0, 0, 1, 1], [], []>} : vector<8x128xf32>, vector<128x32xf32>, vector<8x32xf32> -> vector<8x32xf32>
    %c0_13 = arith.constant 0 : index
    %c96 = arith.constant 96 : index
    %29 = vector.load %arg3[%c0_13, %c96] : memref<8x128xf32, #tpu.memory_space<vmem>>, vector<8x32xf32>
    tpu.vector_store %arg3[%c0_13, %c96], %28 {strides = array<i32>} : memref<8x128xf32, #tpu.memory_space<vmem>>, vector<8x32xf32>,
    return
  }
  func.func @transform_0(%arg0: i32) -> (i32, i32) {
    %c0_i32 = arith.constant 0 : i32
    %c0_i32_0 = arith.constant 0 : i32
    return %arg0, %c0_i32 : i32, i32
  }
  func.func @transform_1(%arg0: i32) -> (i32, i32) {
    %c0_i32 = arith.constant 0 : i32
    %c0_i32_0 = arith.constant 0 : i32
    %c0_i32_1 = arith.constant 0 : i32
    return %c0_i32, %c0_i32_0 : i32, i32
  }
  func.func @transform_2(%arg0: i32) -> (i32, i32) {
    %c0_i32 = arith.constant 0 : i32
    %c0_i32_0 = arith.constant 0 : i32
    return %arg0, %c0_i32 : i32, i32
  }
}

</mosaic_0001>

<llo_original>
// kernel: tpu_custom_call.1
$region0: #{tpu_custom_call.1}
  #allocation0 [shape = 'u32[]', space=smem, size = 0x4, offset = 0x4, fixed_abs, tag = 'smem constant byte address 0x4 - core index']
  #allocation1 [shape = 'u32[144,128]{1,0:T(1,128)}', space=vmem, size = 0x12000, scoped, tag = 'internal scratch']
  %s0 = inlined_call_operand.vmem [shape: s32[24,4], index: 0, kind: input, shape index: {}]
  %s1 = inlined_call_operand.vmem [shape: f32[128,32], index: 1, kind: input, shape index: {}]
  %s2 = inlined_call_operand.hbm [shape: f32[24,128], index: 2, kind: output, shape index: {}]
  %s3 = sld [smem:[#allocation0]]
  $region41: #{tpu_custom_call.1} parent=0
    _
  %s5 = ssub.s32 1, %s3
  %s6 = scalar_select 0, %s5, %s3
  $region1: #{tpu_custom_call.1} parent=0
    #allocation2 [shape = 'u8[8192]{0}', space=vmem, size = 0x2000, scoped, tag = 'output window, operand 0']
    #allocation3 [shape = 's32[2]{0}', space=sflag, size = 0x8, scoped, tag = 'scoped memory for tpu_custom_call.1']
    %7 = vsyncpa [#allocation3], 0
    %s8 = scalar_lea.sflag [#allocation3], 1
    %9 = vsyncpa %s8, 0
    loop: start=0, step=1, limit=5
    $region2: #{tpu_custom_call.1} parent=1 // loop_pre_header
      _
    $region3: #{tpu_custom_call.1} parent=1 // loop_header
      %s11 = sphi 0, %s15
      %p12 = scmp.ge.s32.totalorder %s11, 5
      %s21 = sphi 0, %s23
      %s24 = sphi 0, %s21
      %s25 = sphi 0, %s24
      %s41 = sphi 0, %s25
      %s45 = sphi 0, %s45
      %s47 = sphi 0, %s45
      %s48 = sphi 0, %s47
      %s62 = sphi 0, %s48
      %s68 = sphi 0, %s70
      %s71 = sphi 0, %s68
      %s72 = sphi 0, %s71
      %s88 = sphi 0, %s72
    $region4: #{tpu_custom_call.1} parent=1 // loop_header_branch
      %14 = sbr.rel (%p12) target = $region8
    $region5: #{tpu_custom_call.1} parent=1 // loop_body
      %s16 = ssub.s32 %s11, 1
      %s17 = ssub.s32 %s11, 2
      %s18 = sadd.s32 %s11, 1
      %s19 = ssub.s32 %s11, %s18
      %p20 = scmp.eq.s32.totalorder %s19, 0
      %s22 = sadd.s32 %s21, 1
      %s23 = scalar_select %p20, %s21, %s22
      %p26 = pneg %p20
      %p27 = scmp.eq.s32.totalorder %s11, 2
      %p28 = por %p26, %p27
      %p29 = scmp.ne.s32.totalorder %s21, %s24
      %p30 = scmp.eq.s32.totalorder %s11, 0
      %p31 = por %p29, %p30
      %p32 = scmp.ne.s32.totalorder %s21, %s24
      %p33 = scmp.eq.s32.totalorder %s16, 2
      %p34 = por %p32, %p33
      %p35 = scmp.ne.s32.totalorder %s24, %s25
      %p36 = scmp.eq.s32.totalorder %s16, 0
      %p37 = por %p35, %p36
      %p38 = scmp.ne.s32.totalorder %s24, %s25
      %p39 = scmp.eq.s32.totalorder %s17, 2
      %p40 = por %p38, %p39
      %p42 = scmp.ne.s32.totalorder %s25, %s41
      %p43 = scmp.eq.s32.totalorder %s17, 0
      %p44 = por %p42, %p43
      %s46 = sadd.s32 %s45, 1
      %p49 = scmp.eq.s32.totalorder %s11, 2
      %p50 = scmp.ne.s32.totalorder %s45, %s47
      %p51 = scmp.eq.s32.totalorder %s11, 0
      %p52 = por %p50, %p51
      %p53 = scmp.ne.s32.totalorder %s45, %s47
      %p54 = scmp.eq.s32.totalorder %s16, 2
      %p55 = por %p53, %p54
      %p56 = scmp.ne.s32.totalorder %s47, %s48
      %p57 = scmp.eq.s32.totalorder %s16, 0
      %p58 = por %p56, %p57
      %p59 = scmp.ne.s32.totalorder %s47, %s48
      %p60 = scmp.eq.s32.totalorder %s17, 2
      %p61 = por %p59, %p60
      %p63 = scmp.ne.s32.totalorder %s48, %s62
      %p64 = scmp.eq.s32.totalorder %s17, 0
      %p65 = por %p63, %p64
      %s66 = ssub.s32 %s11, %s18
      %p67 = scmp.eq.s32.totalorder %s66, 0
      %s69 = sadd.s32 %s68, 1
      %s70 = scalar_select %p67, %s68, %s69
      %p73 = pneg %p67
      %p74 = scmp.eq.s32.totalorder %s11, 2
      %p75 = por %p73, %p74
      %p76 = scmp.ne.s32.totalorder %s68, %s71
      %p77 = scmp.eq.s32.totalorder %s11, 0
      %p78 = por %p76, %p77
      %p79 = scmp.ne.s32.totalorder %s68, %s71
      %p80 = scmp.eq.s32.totalorder %s16, 2
      %p81 = por %p79, %p80
      %p82 = scmp.ne.s32.totalorder %s71, %s72
      %p83 = scmp.eq.s32.totalorder %s16, 0
      %p84 = por %p82, %p83
      %p85 = scmp.ne.s32.totalorder %s71, %s72
      %p86 = scmp.eq.s32.totalorder %s17, 2
      %p87 = por %p85, %p86
      %p89 = scmp.ne.s32.totalorder %s72, %s88
      %p90 = scmp.eq.s32.totalorder %s17, 0
      %p91 = por %p89, %p90
      %p92 = scmp.le.s32.totalorder 1, %s11
      %p93 = scmp.lt.s32.totalorder %s11, 4
      %p94 = pnand %p92, %p93
      %p95 = pneg %p94
      // Predicated region
      $region9: #{tpu_custom_call.1} parent=5 // pred_check
        _
      $region10: #{tpu_custom_call.1} parent=5 // pred_check_branch
        %97 = sbr.rel (%p94) target = $region12
      $region11: #{tpu_custom_call.1} parent=5 // pred_region
        %s98 = ssub.s32 %s11, 1
        // Predicated region
        $region13: #{tpu_custom_call.1} parent=11 // pred_check
          %p99 = pneg %p58
        $region14: #{tpu_custom_call.1} parent=11 // pred_check_branch
          %101 = sbr.rel (%p99) target = $region16
        $region15: #{tpu_custom_call.1} parent=11 // pred_region
          _
        $region16: #{tpu_custom_call.1} parent=11 // pred_fallthru
          _
      $region12: #{tpu_custom_call.1} parent=5 // pred_fallthru
        _
      %p102 = scmp.lt.s32.totalorder %s11, 3
      // Predicated region
      $region17: #{tpu_custom_call.1} parent=5 // pred_check
        %p103 = pneg %p102
      $region18: #{tpu_custom_call.1} parent=5 // pred_check_branch
        %105 = sbr.rel (%p103) target = $region20
      $region19: #{tpu_custom_call.1} parent=5 // pred_region
        // Predicated region
        $region21: #{tpu_custom_call.1} parent=19 // pred_check
          %p106 = pneg %p31
        $region22: #{tpu_custom_call.1} parent=19 // pred_check_branch
          %108 = sbr.rel (%p106) target = $region24
        $region23: #{tpu_custom_call.1} parent=19 // pred_region
          %p109 = scmp.lt.s32.totalorder %s11, 2
          %s110 = scalar_select %p109, %s11, 2
          %s111 = smul.addr %s110, 8
          %s112 = scalar_lea.vmem %s0, %s111
        $region24: #{tpu_custom_call.1} parent=19 // pred_fallthru
          _
      $region20: #{tpu_custom_call.1} parent=5 // pred_fallthru
        _
      %p113 = scmp.le.s32.totalorder 1, %s11
      %p114 = scmp.lt.s32.totalorder %s11, 4
      %p115 = pnand %p113, %p114
      %p116 = pneg %p115
      // Predicated region
      $region25: #{tpu_custom_call.1} parent=5 // pred_check
        _
      $region26: #{tpu_custom_call.1} parent=5 // pred_check_branch
        %118 = sbr.rel (%p115) target = $region28
      $region27: #{tpu_custom_call.1} parent=5 // pred_region
        %s119 = ssub.s32 %s11, 1
        %p120 = scmp.lt.s32.totalorder %s16, 2
        %s121 = scalar_select %p120, %s16, 2
        %s122 = smul.addr %s121, 8
        %s123 = scalar_lea.vmem %s0, %s122
        %p124 = pneg %p37
        %p125 = pneg %p34
        %p126 = pneg %p58
        %p127 = pneg %p55
        %p128 = pneg %p84
        %p129 = pneg %p81
        %s130 = sand.u32 %s71, 1
        %s131 = scalar_lea.sflag [#allocation3], %s130
        %s132 = sand.u32 %s71, 1
        %s133 = smul.addr %s132, 8
        %s134 = scalar_lea.vmem [#allocation2], %s133
        %p135 = scmp.lt.s32.totalorder %s16, 2
        %s136 = scalar_select %p135, %s16, 2
        %s137 = smul.addr %s136, 8
        %s138 = scalar_lea.vmem %s0, %s137
        %v139 = vld [vmem:[%s1] sm:$0xff]
        %v140 = vld [vmem:[%s1 + $0x8] sm:$0xff]
        %v141 = vld [vmem:[%s1 + $0x10] sm:$0xff]
        %v142 = vld [vmem:[%s1 + $0x18] sm:$0xff]
        %v143 = vld [vmem:[%s1 + $0x20] sm:$0xff]
        %v144 = vld [vmem:[%s1 + $0x28] sm:$0xff]
        %v145 = vld [vmem:[%s1 + $0x30] sm:$0xff]
        %v146 = vld [vmem:[%s1 + $0x38] sm:$0xff]
        %v147 = vld [vmem:[%s1 + $0x40] sm:$0xff]
        %v148 = vld [vmem:[%s1 + $0x48] sm:$0xff]
        %v149 = vld [vmem:[%s1 + $0x50] sm:$0xff]
        %v150 = vld [vmem:[%s1 + $0x58] sm:$0xff]
        %v151 = vld [vmem:[%s1 + $0x60] sm:$0xff]
        %v152 = vld [vmem:[%s1 + $0x68] sm:$0xff]
        %v153 = vld [vmem:[%s1 + $0x70] sm:$0xff]
        %v154 = vld [vmem:[%s1 + $0x78] sm:$0xff]
        %v155 = vlaneseq
        %v156 = vand.u32 %v155, 127
        %v157 = vld [vmem:[%s138] sm:$0xff]
        %158 = vset.pattern.permute.xlu0 0
        %159 = vperm.xlu0 %158, %v157
        %v160 = vpop.permute.xlu0 %159
        %vm161 = vcmp.eq.s32.totalorder %v156, %v160
        %v162 = vsel %vm161, 1, 0
        %v163 = vcvt.s32.f32 %v162
        %164 = vmatprep.subr.mxu0 0.0
        %165 = vmatpush1.msra.mxu0 %v139
        %166 = vmatprep.subr.mxu0 0.0
        %167 = vmatpush1.msra.mxu0 %v140
        %168 = vmatprep.subr.mxu0 0.0
        %169 = vmatpush1.msra.mxu0 %v141
        %170 = vmatprep.subr.mxu0 0.0
        %171 = vmatpush1.msra.mxu0 %v142
        %172 = vmatprep.subr.mxu0 0.0
        %173 = vmatpush1.msra.mxu0 %v143
        %174 = vmatprep.subr.mxu0 0.0
        %175 = vmatpush1.msra.mxu0 %v144
        %176 = vmatprep.subr.mxu0 0.0
        %177 = vmatpush1.msra.mxu0 %v145
        %178 = vmatprep.subr.mxu0 0.0
        %179 = vmatpush1.msra.mxu0 %v146
        %180 = vmatprep.subr.mxu0 0.0
        %181 = vmatpush1.msra.mxu0 %v147
        %182 = vmatprep.subr.mxu0 0.0
        %183 = vmatpush1.msra.mxu0 %v148
        %184 = vmatprep.subr.mxu0 0.0
        %185 = vmatpush1.msra.mxu0 %v149
        %186 = vmatprep.subr.mxu0 0.0
        %187 = vmatpush1.msra.mxu0 %v150
        %188 = vmatprep.subr.mxu0 0.0
        %189 = vmatpush1.msra.mxu0 %v151
        %190 = vmatprep.subr.mxu0 0.0
        %191 = vmatpush1.msra.mxu0 %v152
        %192 = vmatprep.subr.mxu0 0.0
        %193 = vmatpush1.msra.mxu0 %v153
        %194 = vmatprep.subr.mxu0 0.0
        %195 = vmatpush1.msra.mxu0 %v154
        %196 = vmatprep.subr.mxu0 0.0
        %197 = vmatpush1.msra.mxu0 0.0
        %198 = vmatprep.subr.mxu0 0.0
        %199 = vmatpush1.msra.mxu0 0.0
        %200 = vmatprep.subr.mxu0 0.0
        %201 = vmatpush1.msra.mxu0 0.0
        %202 = vmatprep.subr.mxu0 0.0
        %203 = vmatpush1.msra.mxu0 0.0
        %204 = vmatprep.subr.mxu0 0.0
        %205 = vmatpush1.msra.mxu0 0.0
        %206 = vmatprep.subr.mxu0 0.0
        %207 = vmatpush1.msra.mxu0 0.0
        %208 = vmatprep.subr.mxu0 0.0
        %209 = vmatpush1.msra.mxu0 0.0
        %210 = vmatprep.subr.mxu0 0.0
        %211 = vmatpush1.msra.mxu0 0.0
        %212 = vmatprep.subr.mxu0 0.0
        %213 = vmatpush1.msra.mxu0 0.0
        %214 = vmatprep.subr.mxu0 0.0
        %215 = vmatpush1.msra.mxu0 0.0
        %216 = vmatprep.subr.mxu0 0.0
        %217 = vmatpush1.msra.mxu0 0.0
        %218 = vmatprep.subr.mxu0 0.0
        %219 = vmatpush1.msra.mxu0 0.0
        %220 = vmatprep.subr.mxu0 0.0
        %221 = vmatpush1.msra.mxu0 0.0
        %222 = vmatprep.subr.mxu0 0.0
        %223 = vmatpush1.msra.mxu0 0.0
        %224 = vmatprep.subr.mxu0 0.0
        %225 = vmatpush1.msra.mxu0 0.0
        %226 = vmatprep.subr.mxu0 0.0
        %227 = vmatpush1.msra.mxu0 0.0
        %228 = vmatprep.mubr.f32.mxu0 0.0
        %229 = vmatmul.mubr.f32.gmra.mrb[0].mxu0 %v163
        %v230 = vpop.f32.mrb[0].mxu0
        %v231 = vadd.f32 0.0, %v230
        %v232 = vpop.f32.mrb[0].mxu0
        %233 = vdwg.mxu0
        %vm234 = vcmask 261120
        %235 = vst.msk [vmem:[%s134] sm:$0xff] %vm234, %v231
        %v236 = vld [vmem:[%s138] sm:$0xff]
        %237 = vset.pattern.permute.xlu0 1
        %238 = vperm.xlu0 %237, %v236
        %v239 = vpop.permute.xlu0 %238
        %vm240 = vcmp.eq.s32.totalorder %v156, %v239
        %v241 = vsel %vm240, 1, 0
        %v242 = vcvt.s32.f32 %v241
        %243 = vmatprep.subr.mxu0 0.0
        %244 = vmatpush1.msra.mxu0 %v139
        %245 = vmatprep.subr.mxu0 0.0
        %246 = vmatpush1.msra.mxu0 %v140
        %247 = vmatprep.subr.mxu0 0.0
        %248 = vmatpush1.msra.mxu0 %v141
        %249 = vmatprep.subr.mxu0 0.0
        %250 = vmatpush1.msra.mxu0 %v142
        %251 = vmatprep.subr.mxu0 0.0
        %252 = vmatpush1.msra.mxu0 %v143
        %253 = vmatprep.subr.mxu0 0.0
        %254 = vmatpush1.msra.mxu0 %v144
        %255 = vmatprep.subr.mxu0 0.0
        %256 = vmatpush1.msra.mxu0 %v145
        %257 = vmatprep.subr.mxu0 0.0
        %258 = vmatpush1.msra.mxu0 %v146
        %259 = vmatprep.subr.mxu0 0.0
        %260 = vmatpush1.msra.mxu0 %v147
        %261 = vmatprep.subr.mxu0 0.0
        %262 = vmatpush1.msra.mxu0 %v148
        %263 = vmatprep.subr.mxu0 0.0
        %264 = vmatpush1.msra.mxu0 %v149
        %265 = vmatprep.subr.mxu0 0.0
        %266 = vmatpush1.msra.mxu0 %v150
        %267 = vmatprep.subr.mxu0 0.0
        %268 = vmatpush1.msra.mxu0 %v151
        %269 = vmatprep.subr.mxu0 0.0
        %270 = vmatpush1.msra.mxu0 %v152
        %271 = vmatprep.subr.mxu0 0.0
        %272 = vmatpush1.msra.mxu0 %v153
        %273 = vmatprep.subr.mxu0 0.0
        %274 = vmatpush1.msra.mxu0 %v154
        %275 = vmatprep.subr.mxu0 0.0
        %276 = vmatpush1.msra.mxu0 0.0
        %277 = vmatprep.subr.mxu0 0.0
        %278 = vmatpush1.msra.mxu0 0.0
        %279 = vmatprep.subr.mxu0 0.0
        %280 = vmatpush1.msra.mxu0 0.0
        %281 = vmatprep.subr.mxu0 0.0
        %282 = vmatpush1.msra.mxu0 0.0
        %283 = vmatprep.subr.mxu0 0.0
        %284 = vmatpush1.msra.mxu0 0.0
        %285 = vmatprep.subr.mxu0 0.0
        %286 = vmatpush1.msra.mxu0 0.0
        %287 = vmatprep.subr.mxu0 0.0
        %288 = vmatpush1.msra.mxu0 0.0
        %289 = vmatprep.subr.mxu0 0.0
        %290 = vmatpush1.msra.mxu0 0.0
        %291 = vmatprep.subr.mxu0 0.0
        %292 = vmatpush1.msra.mxu0 0.0
        %293 = vmatprep.subr.mxu0 0.0
        %294 = vmatpush1.msra.mxu0 0.0
        %295 = vmatprep.subr.mxu0 0.0
        %296 = vmatpush1.msra.mxu0 0.0
        %297 = vmatprep.subr.mxu0 0.0
        %298 = vmatpush1.msra.mxu0 0.0
        %299 = vmatprep.subr.mxu0 0.0
        %300 = vmatpush1.msra.mxu0 0.0
        %301 = vmatprep.subr.mxu0 0.0
        %302 = vmatpush1.msra.mxu0 0.0
        %303 = vmatprep.subr.mxu0 0.0
        %304 = vmatpush1.msra.mxu0 0.0
        %305 = vmatprep.subr.mxu0 0.0
        %306 = vmatpush1.msra.mxu0 0.0
        %307 = vmatprep.mubr.f32.mxu0 0.0
        %308 = vmatmul.mubr.f32.gmra.mrb[0].mxu0 %v242
        %v309 = vpop.f32.mrb[0].mxu0
        %v310 = vadd.f32 0.0, %v309
        %v311 = vpop.f32.mrb[0].mxu0
        %312 = vdwg.mxu0
        %314 = vrot.lane.b32.xlu0 %v310, 32
        %v315 = vpop.permute.xlu0 %314
        %vm317 = vcmask 523520
        %318 = vst.msk [vmem:[%s134] sm:$0xff] %vm317, %v315
        %v319 = vld [vmem:[%s138] sm:$0xff]
        %320 = vset.pattern.permute.xlu0 2
        %321 = vperm.xlu0 %320, %v319
        %v322 = vpop.permute.xlu0 %321
        %vm323 = vcmp.eq.s32.totalorder %v156, %v322
        %v324 = vsel %vm323, 1, 0
        %v325 = vcvt.s32.f32 %v324
        %326 = vmatprep.subr.mxu0 0.0
        %327 = vmatpush1.msra.mxu0 %v139
        %328 = vmatprep.subr.mxu0 0.0
        %329 = vmatpush1.msra.mxu0 %v140
        %330 = vmatprep.subr.mxu0 0.0
        %331 = vmatpush1.msra.mxu0 %v141
        %332 = vmatprep.subr.mxu0 0.0
        %333 = vmatpush1.msra.mxu0 %v142
        %334 = vmatprep.subr.mxu0 0.0
        %335 = vmatpush1.msra.mxu0 %v143
        %336 = vmatprep.subr.mxu0 0.0
        %337 = vmatpush1.msra.mxu0 %v144
        %338 = vmatprep.subr.mxu0 0.0
        %339 = vmatpush1.msra.mxu0 %v145
        %340 = vmatprep.subr.mxu0 0.0
        %341 = vmatpush1.msra.mxu0 %v146
        %342 = vmatprep.subr.mxu0 0.0
        %343 = vmatpush1.msra.mxu0 %v147
        %344 = vmatprep.subr.mxu0 0.0
        %345 = vmatpush1.msra.mxu0 %v148
        %346 = vmatprep.subr.mxu0 0.0
        %347 = vmatpush1.msra.mxu0 %v149
        %348 = vmatprep.subr.mxu0 0.0
        %349 = vmatpush1.msra.mxu0 %v150
        %350 = vmatprep.subr.mxu0 0.0
        %351 = vmatpush1.msra.mxu0 %v151
        %352 = vmatprep.subr.mxu0 0.0
        %353 = vmatpush1.msra.mxu0 %v152
        %354 = vmatprep.subr.mxu0 0.0
        %355 = vmatpush1.msra.mxu0 %v153
        %356 = vmatprep.subr.mxu0 0.0
        %357 = vmatpush1.msra.mxu0 %v154
        %358 = vmatprep.subr.mxu0 0.0
        %359 = vmatpush1.msra.mxu0 0.0
        %360 = vmatprep.subr.mxu0 0.0
        %361 = vmatpush1.msra.mxu0 0.0
        %362 = vmatprep.subr.mxu0 0.0
        %363 = vmatpush1.msra.mxu0 0.0
        %364 = vmatprep.subr.mxu0 0.0
        %365 = vmatpush1.msra.mxu0 0.0
        %366 = vmatprep.subr.mxu0 0.0
        %367 = vmatpush1.msra.mxu0 0.0
        %368 = vmatprep.subr.mxu0 0.0
        %369 = vmatpush1.msra.mxu0 0.0
        %370 = vmatprep.subr.mxu0 0.0
        %371 = vmatpush1.msra.mxu0 0.0
        %372 = vmatprep.subr.mxu0 0.0
        %373 = vmatpush1.msra.mxu0 0.0
        %374 = vmatprep.subr.mxu0 0.0
        %375 = vmatpush1.msra.mxu0 0.0
        %376 = vmatprep.subr.mxu0 0.0
        %377 = vmatpush1.msra.mxu0 0.0
        %378 = vmatprep.subr.mxu0 0.0
        %379 = vmatpush1.msra.mxu0 0.0
        %380 = vmatprep.subr.mxu0 0.0
        %381 = vmatpush1.msra.mxu0 0.0
        %382 = vmatprep.subr.mxu0 0.0
        %383 = vmatpush1.msra.mxu0 0.0
        %384 = vmatprep.subr.mxu0 0.0
        %385 = vmatpush1.msra.mxu0 0.0
        %386 = vmatprep.subr.mxu0 0.0
        %387 = vmatpush1.msra.mxu0 0.0
        %388 = vmatprep.subr.mxu0 0.0
        %389 = vmatpush1.msra.mxu0 0.0
        %390 = vmatprep.mubr.f32.mxu0 0.0
        %391 = vmatmul.mubr.f32.gmra.mrb[0].mxu0 %v325
        %v392 = vpop.f32.mrb[0].mxu0
        %v393 = vadd.f32 0.0, %v392
        %v394 = vpop.f32.mrb[0].mxu0
        %395 = vdwg.mxu0
        %397 = vrot.lane.b32.xlu0 %v393, 64
        %v398 = vpop.permute.xlu0 %397
        %vm400 = vcmask 785920
        %401 = vst.msk [vmem:[%s134] sm:$0xff] %vm400, %v398
        %v402 = vld [vmem:[%s138] sm:$0xff]
        %403 = vset.pattern.permute.xlu0 3
        %404 = vperm.xlu0 %403, %v402
        %v405 = vpop.permute.xlu0 %404
        %vm406 = vcmp.eq.s32.totalorder %v156, %v405
        %v407 = vsel %vm406, 1, 0
        %v408 = vcvt.s32.f32 %v407
        %409 = vmatprep.subr.mxu0 0.0
        %410 = vmatpush1.msra.mxu0 %v139
        %411 = vmatprep.subr.mxu0 0.0
        %412 = vmatpush1.msra.mxu0 %v140
        %413 = vmatprep.subr.mxu0 0.0
        %414 = vmatpush1.msra.mxu0 %v141
        %415 = vmatprep.subr.mxu0 0.0
        %416 = vmatpush1.msra.mxu0 %v142
        %417 = vmatprep.subr.mxu0 0.0
        %418 = vmatpush1.msra.mxu0 %v143
        %419 = vmatprep.subr.mxu0 0.0
        %420 = vmatpush1.msra.mxu0 %v144
        %421 = vmatprep.subr.mxu0 0.0
        %422 = vmatpush1.msra.mxu0 %v145
        %423 = vmatprep.subr.mxu0 0.0
        %424 = vmatpush1.msra.mxu0 %v146
        %425 = vmatprep.subr.mxu0 0.0
        %426 = vmatpush1.msra.mxu0 %v147
        %427 = vmatprep.subr.mxu0 0.0
        %428 = vmatpush1.msra.mxu0 %v148
        %429 = vmatprep.subr.mxu0 0.0
        %430 = vmatpush1.msra.mxu0 %v149
        %431 = vmatprep.subr.mxu0 0.0
        %432 = vmatpush1.msra.mxu0 %v150
        %433 = vmatprep.subr.mxu0 0.0
        %434 = vmatpush1.msra.mxu0 %v151
        %435 = vmatprep.subr.mxu0 0.0
        %436 = vmatpush1.msra.mxu0 %v152
        %437 = vmatprep.subr.mxu0 0.0
        %438 = vmatpush1.msra.mxu0 %v153
        %439 = vmatprep.subr.mxu0 0.0
        %440 = vmatpush1.msra.mxu0 %v154
        %441 = vmatprep.subr.mxu0 0.0
        %442 = vmatpush1.msra.mxu0 0.0
        %443 = vmatprep.subr.mxu0 0.0
        %444 = vmatpush1.msra.mxu0 0.0
        %445 = vmatprep.subr.mxu0 0.0
        %446 = vmatpush1.msra.mxu0 0.0
        %447 = vmatprep.subr.mxu0 0.0
        %448 = vmatpush1.msra.mxu0 0.0
        %449 = vmatprep.subr.mxu0 0.0
        %450 = vmatpush1.msra.mxu0 0.0
        %451 = vmatprep.subr.mxu0 0.0
        %452 = vmatpush1.msra.mxu0 0.0
        %453 = vmatprep.subr.mxu0 0.0
        %454 = vmatpush1.msra.mxu0 0.0
        %455 = vmatprep.subr.mxu0 0.0
        %456 = vmatpush1.msra.mxu0 0.0
        %457 = vmatprep.subr.mxu0 0.0
        %458 = vmatpush1.msra.mxu0 0.0
        %459 = vmatprep.subr.mxu0 0.0
        %460 = vmatpush1.msra.mxu0 0.0
        %461 = vmatprep.subr.mxu0 0.0
        %462 = vmatpush1.msra.mxu0 0.0
        %463 = vmatprep.subr.mxu0 0.0
        %464 = vmatpush1.msra.mxu0 0.0
        %465 = vmatprep.subr.mxu0 0.0
        %466 = vmatpush1.msra.mxu0 0.0
        %467 = vmatprep.subr.mxu0 0.0
        %468 = vmatpush1.msra.mxu0 0.0
        %469 = vmatprep.subr.mxu0 0.0
        %470 = vmatpush1.msra.mxu0 0.0
        %471 = vmatprep.subr.mxu0 0.0
        %472 = vmatpush1.msra.mxu0 0.0
        %473 = vmatprep.mubr.f32.mxu0 0.0
        %474 = vmatmul.mubr.f32.gmra.mrb[0].mxu0 %v408
        %v475 = vpop.f32.mrb[0].mxu0
        %v476 = vadd.f32 0.0, %v475
        %v477 = vpop.f32.mrb[0].mxu0
        %478 = vdwg.mxu0
        %480 = vrot.lane.b32.xlu0 %v476, 96
        %v481 = vpop.permute.xlu0 %480
        %vm483 = vcmask 1048320
        %484 = vst.msk [vmem:[%s134] sm:$0xff] %vm483, %v481
        %s485 = sand.u32 %s71, 1
        %s486 = scalar_lea.sflag [#allocation3], %s485
        %s487 = sand.u32 %s71, 1
        %s488 = smul.addr %s487, 8
        %s489 = scalar_lea.vmem [#allocation2], %s488
        // Predicated region
        $region29: #{tpu_custom_call.1} parent=27 // pred_check
          %p490 = pneg %p81
        $region30: #{tpu_custom_call.1} parent=27 // pred_check_branch
          %492 = sbr.rel (%p490) target = $region32
        $region31: #{tpu_custom_call.1} parent=27 // pred_region
          %s494 = ssub.s32 128, 128
          %495 = vsyncadd %s486, %s494
          %s496 = smul.addr %s16, 128
          %s497 = scalar_lea.hbm %s2, %s496
          %s499 = sshll.u32 %s489, 4
          %s500 = int_to_ptr.vmem [resolvable:$true] %s499
          %502 = dma.vmem_to_hbm [thread:$0]  %s500, 128, %s497, %s486
        $region32: #{tpu_custom_call.1} parent=27 // pred_fallthru
          _
      $region28: #{tpu_custom_call.1} parent=5 // pred_fallthru
        _
      %p503 = scmp.le.s32.totalorder 2, %s11
      // Predicated region
      $region33: #{tpu_custom_call.1} parent=5 // pred_check
        %p504 = pneg %p503
      $region34: #{tpu_custom_call.1} parent=5 // pred_check_branch
        %506 = sbr.rel (%p504) target = $region36
      $region35: #{tpu_custom_call.1} parent=5 // pred_region
        %s507 = ssub.s32 %s11, 2
        // Predicated region
        $region37: #{tpu_custom_call.1} parent=35 // pred_check
          %p508 = pneg %p87
        $region38: #{tpu_custom_call.1} parent=35 // pred_check_branch
          %510 = sbr.rel (%p508) target = $region40
        $region39: #{tpu_custom_call.1} parent=35 // pred_region
          %s511 = sand.u32 %s72, 1
          %s512 = scalar_lea.sflag [#allocation3], %s511
          %s513 = sand.u32 %s72, 1
          %s514 = smul.addr %s513, 8
          %s515 = scalar_lea.vmem [#allocation2], %s514
          %516 = dma.done %s512, 128
        $region40: #{tpu_custom_call.1} parent=35 // pred_fallthru
          _
      $region36: #{tpu_custom_call.1} parent=5 // pred_fallthru
        _
    $region6: #{tpu_custom_call.1} parent=1 // loop_footer
      %s15 = sadd.s32 1, %s11
    $region7: #{tpu_custom_call.1} parent=1 // loop_footer_branch
      %10 = sbr.rel target = $region3
    $region8: #{tpu_custom_call.1} parent=1 // loop_exit
      _
    %517 = vsyncpa [#allocation3], 1
    %s518 = scalar_lea.sflag [#allocation3], 1
    %519 = vsyncpa %s518, 1

</llo_original>
